<compile_context>
chip_gen: v6e
topology: v6e:2x2x1
jax: 0.10.0
libtpu: 0.0.40
codegen_flags: <defaults>
</compile_context>

<pallas_src>
import functools

import jax
import jax.numpy as jnp
from jax.experimental import pallas as pl
from jax.experimental.pallas import tpu as pltpu


# ---------------------------------------------------------------------------
# Hardware-aware budgets.
# ---------------------------------------------------------------------------
def _vmem_capacity_bytes():
    try:
        info = pltpu.get_tpu_info()
    except Exception:
        return 64 * 1024 * 1024
    for attr in ("vmem_capacity_bytes", "vmem_bytes", "vmem_size_bytes"):
        v = getattr(info, attr, None)
        if isinstance(v, int) and v > 0:
            return v
    return 64 * 1024 * 1024


def _budgets():
    """(vmem_limit_bytes, per-tile byte budget)."""
    cap = _vmem_capacity_bytes()
    if cap >= 100 * 1024 * 1024:                 # v5e / v6e: 128 MiB physical
        return 96 * 1024 * 1024, 8 * 1024 * 1024
    return 48 * 1024 * 1024, 4 * 1024 * 1024     # v7x: 64 MiB physical


def _round_up(v, m):
    return ((v + m - 1) // m) * m


def _pick_lane_tile(hw, row_bytes, budget_bytes, max_lanes=None):
    """Largest 128-multiple lane tile fitting budget; ragged tail handled in-kernel."""
    lanes = budget_bytes // max(1, row_bytes)
    lanes = max(128, (lanes // 128) * 128)
    lanes = min(lanes, _round_up(hw, 128))
    if max_lanes is not None:
        lanes = min(lanes, max_lanes)
    return max(lanes, 128)


# ---------------------------------------------------------------------------
# Stage 1: spatial sum (per batch row), VPU accumulation + masked ragged tail.
# ---------------------------------------------------------------------------
def _pool_kernel(x_ref, out_ref, acc_ref, *, hw, t1, needs_mask):
    k = pl.program_id(1)

    @pl.when(k == 0)
    def _():
        acc_ref[...] = jnp.zeros_like(acc_ref)

    x = x_ref[...].astype(jnp.float32)                     # (1, C, t1)
    if needs_mask:
        col = jax.lax.broadcasted_iota(jnp.int32, x.shape, 2) + k * t1
        x = jnp.where(col < hw, x, 0.0)

    # Fold lane-chunks with pure VPU adds (keeps XLU off the per-tile path);
    # the single cross-lane reduce happens once per b in the finalize below.
    partial = x[:, :, 0:128]
    for m in range(1, t1 // 128):
        partial = partial + x[:, :, m * 128:(m + 1) * 128]
    acc_ref[...] += partial                                # (1, C, 128)

    @pl.when(k == pl.num_programs(1) - 1)
    def _():
        out_ref[...] = jnp.sum(acc_ref[...], axis=-1, keepdims=True)  # (1, C, 1)


# ---------------------------------------------------------------------------
# Fused MLP: one grid point, weights DMA'd exactly once.
# ---------------------------------------------------------------------------
def _mlp_kernel(pool_ref, wm_ref, bm_ref, wg_ref, bg_ref,
                gt_ref, va_ref, gsh_ref):
    v_m = jnp.dot(pool_ref[...], wm_ref[...],
                  preferred_element_type=jnp.float32) + bm_ref[...]
    v_m = jnp.maximum(v_m, 0.0)                            # (B, rC)
    gates = jax.nn.sigmoid(
        jnp.dot(v_m, wg_ref[...], preferred_element_type=jnp.float32)
        + bg_ref[...])                                     # (B, 3C)
    C = gt_ref.shape[1]
    gt_ref[...] = gates[:, 0 * C:1 * C]                    # V_t
    va_ref[...] = gates[:, 1 * C:2 * C]                    # V_a
    gsh_ref[...] = gates[:, 2 * C:3 * C]                   # V_sh


# ---------------------------------------------------------------------------
# Stage 2: streaming rescale  feat_t = V_t * x,  feat_sh = V_sh * x.
# Gates come in as (1, C, 1) blocks (C on sublanes) -> no per-step relayout.
# ---------------------------------------------------------------------------
def _scale_kernel(gt_ref, gsh_ref, x_ref, ft_ref, fsh_ref):
    x = x_ref[...]                                         # (1, C, t2)
    ft_ref[...] = (gt_ref[...] * x).astype(ft_ref.dtype)
    fsh_ref[...] = (gsh_ref[...] * x).astype(fsh_ref.dtype)


# ---------------------------------------------------------------------------
# Wrapper
# ---------------------------------------------------------------------------
def cas_pre_module(x, params, out_dtype=None):
    """x: (B, C, H, W).  Returns (feature_t, V_a, feature_sh)."""
    B, C, H, W = x.shape
    HW = H * W
    wm, bm, wt, bt, wa, ba, wsh, bsh = params
    rC = wm.shape[1]
    out_dtype = x.dtype if out_dtype is None else out_dtype

    # Fold mean divisor into W_m; fuse the three gate projections (tiny XLA ops).
    wm_scaled = wm.astype(jnp.float32) / float(HW)               # (C, rC)
    wg = jnp.concatenate([wt, wa, wsh], axis=1).astype(jnp.float32)   # (rC, 3C)
    bg = jnp.concatenate([bt, ba, bsh], axis=1).astype(jnp.float32)   # (1, 3C)
    bm32 = bm.astype(jnp.float32)

    vmem_limit, tile_budget = _budgets()
    x_item = jnp.dtype(x.dtype).itemsize
    o_item = jnp.dtype(out_dtype).itemsize

    x_flat = x.reshape(B, C, HW)     # no padding: ragged tail handled in-kernel

    # ---------------- Stage 1: pooled sum (B-parallel, VPU accumulation) ----
    t1 = _pick_lane_tile(HW, C * x_item,
                         min(tile_budget, (3 * vmem_limit // 4) // 2),
                         max_lanes=4096)
    nk = -(-HW // t1)
    pooled = pl.pallas_call(
        functools.partial(_pool_kernel, hw=HW, t1=t1, needs_mask=(HW % t1 != 0)),
        out_shape=jax.ShapeDtypeStruct((B, C, 1), jnp.float32),
        grid=(B, nk),
        in_specs=[pl.BlockSpec((1, C, t1), lambda b, k: (b, 0, k))],
        out_specs=pl.BlockSpec((1, C, 1), lambda b, k: (b, 0, 0)),
        scratch_shapes=[pltpu.VMEM((1, C, 128), jnp.float32)],
        compiler_params=pltpu.CompilerParams(
            dimension_semantics=("parallel", "arbitrary"),
            vmem_limit_bytes=vmem_limit),
    )(x_flat)

    # ---------------- Fused MLP (tiny, single invocation) -------------------
    pooled2d = pooled.reshape(B, C)
    gate_t, v_a, gate_sh = pl.pallas_call(
        _mlp_kernel,
        out_shape=(jax.ShapeDtypeStruct((B, C), jnp.float32),) * 3,
        grid=(1,),
        in_specs=[
            pl.BlockSpec((B, C), lambda i: (0, 0)),
            pl.BlockSpec((C, rC), lambda i: (0, 0)),
            pl.BlockSpec((1, rC), lambda i: (0, 0)),
            pl.BlockSpec((rC, 3 * C), lambda i: (0, 0)),
            pl.BlockSpec((1, 3 * C), lambda i: (0, 0)),
        ],
        out_specs=(pl.BlockSpec((B, C), lambda i: (0, 0)),) * 3,
        compiler_params=pltpu.CompilerParams(
            dimension_semantics=("arbitrary",),
            vmem_limit_bytes=vmem_limit),
    )(pooled2d, wm_scaled, bm32, wg, bg)

    # ---------------- Stage 2: streaming per-channel rescale ----------------
    # Tiny relayout of the gates outside the streaming loop (review item #8).
    gt_col = gate_t[:, :, None]      # (B, C, 1)
    gsh_col = gate_sh[:, :, None]    # (B, C, 1)

    row_bytes = C * max(x_item, o_item)
    t2 = _pick_lane_tile(HW, row_bytes,
                         min(tile_budget, (3 * vmem_limit // 4) // 6))
    nj = -(-HW // t2)
    feat_t, feat_sh = pl.pallas_call(
        _scale_kernel,
        out_shape=(jax.ShapeDtypeStruct((B, C, HW), out_dtype),) * 2,
        grid=(B, nj),
        in_specs=[
            pl.BlockSpec((1, C, 1), lambda b, j: (b, 0, 0)),    # V_t  (resident per b)
            pl.BlockSpec((1, C, 1), lambda b, j: (b, 0, 0)),    # V_sh (resident per b)
            pl.BlockSpec((1, C, t2), lambda b, j: (b, 0, j)),   # x tile
        ],
        out_specs=(
            pl.BlockSpec((1, C, t2), lambda b, j: (b, 0, j)),
            pl.BlockSpec((1, C, t2), lambda b, j: (b, 0, j)),
        ),
        compiler_params=pltpu.CompilerParams(
            dimension_semantics=("parallel", "parallel"),
            vmem_limit_bytes=vmem_limit),
    )(gt_col, gsh_col, x_flat)

    return (feat_t.reshape(B, C, H, W), v_a, feat_sh.reshape(B, C, H, W))


# ---------------------------------------------------------------------------
# Parameter init (matches CASPreModule.init_fc: normal(std=0.001), zero bias).
# Weights stored as (in_features, out_features) so kernels compute row @ W.
# ---------------------------------------------------------------------------
def init_params(key, C, ratio, std=0.001):
    rC = round(C * 1.0 / ratio)
    k_m, k_t, k_a, k_sh = jax.random.split(key, 4)
    wm = std * jax.random.normal(k_m, (C, rC), jnp.float32)
    bm = jnp.zeros((1, rC), jnp.float32)
    wt = std * jax.random.normal(k_t, (rC, C), jnp.float32)
    bt = jnp.zeros((1, C), jnp.float32)
    wa = std * jax.random.normal(k_a, (rC, C), jnp.float32)
    ba = jnp.zeros((1, C), jnp.float32)
    wsh = std * jax.random.normal(k_sh, (rC, C), jnp.float32)
    bsh = jnp.zeros((1, C), jnp.float32)
    return (wm, bm, wt, bt, wa, ba, wsh, bsh)


def _reference(x, params):
    """Pure-JAX reference mirroring the PyTorch forward (eval mode)."""
    wm, bm, wt, bt, wa, ba, wsh, bsh = params
    v_g = jnp.mean(x, axis=(2, 3))
    v_m = jax.nn.relu(v_g @ wm + bm)
    v_t = jax.nn.sigmoid(v_m @ wt + bt)
    v_a = jax.nn.sigmoid(v_m @ wa + ba)
    v_sh = jax.nn.sigmoid(v_m @ wsh + bsh)
    return v_t[:, :, None, None] * x, v_a, v_sh[:, :, None, None] * x


if __name__ == "__main__":
    key = jax.random.PRNGKey(0)

    # Case 1: lane-aligned spatial size.
    B, C, H, W, ratio = 2, 4, 16, 16, 2
    k_x, k_p, key = jax.random.split(key, 3)
    x = jax.random.normal(k_x, (B, C, H, W), jnp.float32)
    params = init_params(k_p, C, ratio)
    feat_t, v_a, feat_sh = jax.block_until_ready(cas_pre_module(x, params))
    ref_t, ref_a, ref_sh = _reference(x, params)
    assert jnp.allclose(feat_t, ref_t, atol=1e-5), "feature_t mismatch"
    assert jnp.allclose(v_a, ref_a, atol=1e-5), "V_a mismatch"
    assert jnp.allclose(feat_sh, ref_sh, atol=1e-5), "feature_sh mismatch"

    # Case 2: ragged spatial size (HW % 128 != 0) and C not a multiple of 8.
    B2, C2, H2, W2, ratio2 = 2, 5, 7, 7, 2
    k_x2, k_p2 = jax.random.split(key)
    x2 = jax.random.normal(k_x2, (B2, C2, H2, W2), jnp.float32)
    params2 = init_params(k_p2, C2, ratio2)
    ft2, va2, fsh2 = jax.block_until_ready(cas_pre_module(x2, params2))
    rt2, ra2, rsh2 = _reference(x2, params2)
    assert jnp.allclose(ft2, rt2, atol=1e-5), "ragged feature_t mismatch"
    assert jnp.allclose(va2, ra2, atol=1e-5), "ragged V_a mismatch"
    assert jnp.allclose(fsh2, rsh2, atol=1e-5), "ragged feature_sh mismatch"

    print("KERNEL_OK")
</pallas_src>

<mosaic_0001>
module attributes {stable_mosaic.version = 11 : i64} {
  func.func @_pool_kernel(%arg0: i32, %arg1: i32, %arg2: memref<1x4x256xf32, #tpu.memory_space<vmem>>, %arg3: memref<1x4x1xf32, #tpu.memory_space<vmem>>, %arg4: memref<1x4x128xf32, #tpu.memory_space<vmem>>) attributes {dimension_semantics = [#tpu.dimension_semantics<parallel>, #tpu.dimension_semantics<arbitrary>], iteration_bounds = array<i64: 2, 1>, scalar_prefetch = 0 : i64, scratch_operands = 1 : i64, tpu.core_type = #tpu.core_type<tc>, window_params = [{transform_indices = @transform_0, window_bounds = array<i64: 1, 4, 256>}, {transform_indices = @transform_1, window_bounds = array<i64: 1, 4, 1>}]} {
    %c0_i32 = arith.constant 0 : i32
    %0 = arith.cmpi eq, %arg1, %c0_i32 : i32
    %1 = arith.extui %0 : i1 to i32
    %c0_i32_0 = arith.constant 0 : i32
    %2 = arith.cmpi ne, %1, %c0_i32_0 : i32
    scf.if %2 {
      %cst = arith.constant 0.000000e+00 : f32
      %13 = vector.broadcast %cst : f32 to vector<1x4x128xf32>
      %c0_11 = arith.constant 0 : index
      %c0_12 = arith.constant 0 : index
      %c0_13 = arith.constant 0 : index
      %14 = vector.load %arg4[%c0_11, %c0_12, %c0_13] : memref<1x4x128xf32, #tpu.memory_space<vmem>>, vector<1x4x128xf32>
      tpu.vector_store %arg4[%c0_11, %c0_12, %c0_13], %13 {strides = array<i32>} : memref<1x4x128xf32, #tpu.memory_space<vmem>>, vector<1x4x128xf32>,
    } else {
    }
    %c0 = arith.constant 0 : index
    %c0_1 = arith.constant 0 : index
    %c0_2 = arith.constant 0 : index
    %3 = vector.load %arg2[%c0, %c0_1, %c0_2] : memref<1x4x256xf32, #tpu.memory_space<vmem>>, vector<1x4x256xf32>
    %4 = vector.extract_strided_slice %3 {offsets = [0, 0, 0], sizes = [1, 4, 128], strides = [1, 1, 1]} : vector<1x4x256xf32> to vector<1x4x128xf32>
    %5 = vector.extract_strided_slice %3 {offsets = [0, 0, 128], sizes = [1, 4, 128], strides = [1, 1, 1]} : vector<1x4x256xf32> to vector<1x4x128xf32>
    %6 = arith.addf %4, %5 : vector<1x4x128xf32>
    %c0_3 = arith.constant 0 : index
    %c0_4 = arith.constant 0 : index
    %c0_5 = arith.constant 0 : index
    %7 = vector.load %arg4[%c0_3, %c0_4, %c0_5] : memref<1x4x128xf32, #tpu.memory_space<vmem>>, vector<1x4x128xf32>
    %8 = arith.addf %7, %6 : vector<1x4x128xf32>
    %c0_6 = arith.constant 0 : index
    %c0_7 = arith.constant 0 : index
    %c0_8 = arith.constant 0 : index
    %9 = vector.load %arg4[%c0_6, %c0_7, %c0_8] : memref<1x4x128xf32, #tpu.memory_space<vmem>>, vector<1x4x128xf32>
    tpu.vector_store %arg4[%c0_6, %c0_7, %c0_8], %8 {strides = array<i32>} : memref<1x4x128xf32, #tpu.memory_space<vmem>>, vector<1x4x128xf32>,
    %c0_i32_9 = arith.constant 0 : i32
    %10 = arith.cmpi eq, %arg1, %c0_i32_9 : i32
    %11 = arith.extui %10 : i1 to i32
    %c0_i32_10 = arith.constant 0 : i32
    %12 = arith.cmpi ne, %11, %c0_i32_10 : i32
    scf.if %12 {
      %c0_11 = arith.constant 0 : index
      %c0_12 = arith.constant 0 : index
      %c0_13 = arith.constant 0 : index
      %13 = vector.load %arg4[%c0_11, %c0_12, %c0_13] : memref<1x4x128xf32, #tpu.memory_space<vmem>>, vector<1x4x128xf32>
      %cst = arith.constant dense<0.000000e+00> : vector<1x4xf32>
      %14 = vector.multi_reduction <add>, %13, %cst [2] : vector<1x4x128xf32> to vector<1x4xf32>
      %15 = vector.shape_cast %14 : vector<1x4xf32> to vector<1x4x1xf32>
      %c0_14 = arith.constant 0 : index
      %c0_15 = arith.constant 0 : index
      %c0_16 = arith.constant 0 : index
      %16 = vector.load %arg3[%c0_14, %c0_15, %c0_16] : memref<1x4x1xf32, #tpu.memory_space<vmem>>, vector<1x4x1xf32>
      tpu.vector_store %arg3[%c0_14, %c0_15, %c0_16], %15 {strides = array<i32>} : memref<1x4x1xf32, #tpu.memory_space<vmem>>, vector<1x4x1xf32>,
    } else {
    }
    return
  }
  func.func @transform_0(%arg0: i32, %arg1: i32) -> (i32, i32, i32) {
    %c0_i32 = arith.constant 0 : i32
    %c0_i32_0 = arith.constant 0 : i32
    return %arg0, %c0_i32, %arg1 : i32, i32, i32
  }
  func.func @transform_1(%arg0: i32, %arg1: i32) -> (i32, i32, i32) {
    %c0_i32 = arith.constant 0 : i32
    %c0_i32_0 = arith.constant 0 : i32
    %c0_i32_1 = arith.constant 0 : i32
    return %arg0, %c0_i32, %c0_i32_0 : i32, i32, i32
  }
}

</mosaic_0001>

<llo_original>
// kernel: tpu_custom_call.1
$region0: #{tpu_custom_call.1}
  #allocation0 [shape = 'u32[]', space=smem, size = 0x4, offset = 0x4, fixed_abs, tag = 'smem constant byte address 0x4 - core index']
  #allocation1 [shape = 'u32[144,128]{1,0:T(1,128)}', space=vmem, size = 0x12000, scoped, tag = 'internal scratch']
  #allocation2 [shape = 'f32[1,4,128]{2,1,0:T(4,128)}', space=vmem, size = 0x800, scoped, tag = 'scratch operand']
  %s0 = inlined_call_operand.hbm [shape: f32[2,4,256], index: 0, kind: input, shape index: {}]
  %s1 = inlined_call_operand.vmem [shape: f32[2,4,1], index: 1, kind: output, shape index: {}]
  %s2 = sld [smem:[#allocation0]]
  $region49: #{tpu_custom_call.1} parent=0
    _
  %s4 = ssub.s32 1, %s2
  %s5 = scalar_select 0, %s4, %s2
  $region1: #{tpu_custom_call.1} parent=0
    #allocation3 [shape = 'u8[8192]{0}', space=vmem, size = 0x2000, scoped, tag = 'input window, operand 0']
    #allocation4 [shape = 's32[2]{0}', space=sflag, size = 0x8, scoped, tag = 'scoped memory for tpu_custom_call.1']
    %6 = vsyncpa [#allocation4], 0
    %s7 = scalar_lea.sflag [#allocation4], 1
    %8 = vsyncpa %s7, 0
    loop: start=0, step=1, limit=4
    $region2: #{tpu_custom_call.1} parent=1 // loop_pre_header
      _
    $region3: #{tpu_custom_call.1} parent=1 // loop_header
      %s10 = sphi 0, %s14
      %p11 = scmp.ge.s32.totalorder %s10, 4
      %s17 = sphi 0, %s29
      %s18 = sphi 0, %s25
      %s19 = sphi 0, %s17
      %s20 = sphi 0, %s18
      %s21 = sphi 0, %s19
      %s22 = sphi 0, %s20
      %s34 = sphi 0, %s36
      %s37 = sphi 0, %s34
      %s38 = sphi 0, %s37
      %s54 = sphi 0, %s38
      %s60 = sphi 0, %s62
      %s63 = sphi 0, %s60
      %s64 = sphi 0, %s63
      %s80 = sphi 0, %s64
    $region4: #{tpu_custom_call.1} parent=1 // loop_header_branch
      %13 = sbr.rel (%p11) target = $region8
    $region5: #{tpu_custom_call.1} parent=1 // loop_body
      %s15 = ssub.s32 %s10, 1
      %s16 = ssub.s32 %s10, 2
      %s23 = sadd.s32 1, %s18
      %p24 = scmp.ge.s32.totalorder %s23, 1
      %s25 = scalar_select %p24, 0, %s23
      %s26 = sadd.s32 1, %s17
      %s27 = scalar_select %p24, %s26, %s17
      %p28 = scmp.ge.s32.totalorder %s27, 2
      %s29 = scalar_select %p28, 0, %s27
      %s30 = ssub.s32 %s17, %s29
      %s31 = ssub.s32 %s18, %s25
      %s32 = sor.u32 %s30, %s31
      %p33 = scmp.eq.s32.totalorder %s32, 0
      %s35 = sadd.s32 %s34, 1
      %s36 = scalar_select %p33, %s34, %s35
      %p39 = pneg %p33
      %p40 = scmp.eq.s32.totalorder %s10, 1
      %p41 = por %p39, %p40
      %p42 = scmp.ne.s32.totalorder %s34, %s37
      %p43 = scmp.eq.s32.totalorder %s10, 0
      %p44 = por %p42, %p43
      %p45 = scmp.ne.s32.totalorder %s34, %s37
      %p46 = scmp.eq.s32.totalorder %s15, 1
      %p47 = por %p45, %p46
      %p48 = scmp.ne.s32.totalorder %s37, %s38
      %p49 = scmp.eq.s32.totalorder %s15, 0
      %p50 = por %p48, %p49
      %p51 = scmp.ne.s32.totalorder %s37, %s38
      %p52 = scmp.eq.s32.totalorder %s16, 1
      %p53 = por %p51, %p52
      %p55 = scmp.ne.s32.totalorder %s38, %s54
      %p56 = scmp.eq.s32.totalorder %s16, 0
      %p57 = por %p55, %p56
      %s58 = ssub.s32 %s17, %s29
      %p59 = scmp.eq.s32.totalorder %s58, 0
      %s61 = sadd.s32 %s60, 1
      %s62 = scalar_select %p59, %s60, %s61
      %p65 = pneg %p59
      %p66 = scmp.eq.s32.totalorder %s10, 1
      %p67 = por %p65, %p66
      %p68 = scmp.ne.s32.totalorder %s60, %s63
      %p69 = scmp.eq.s32.totalorder %s10, 0
      %p70 = por %p68, %p69
      %p71 = scmp.ne.s32.totalorder %s60, %s63
      %p72 = scmp.eq.s32.totalorder %s15, 1
      %p73 = por %p71, %p72
      %p74 = scmp.ne.s32.totalorder %s63, %s64
      %p75 = scmp.eq.s32.totalorder %s15, 0
      %p76 = por %p74, %p75
      %p77 = scmp.ne.s32.totalorder %s63, %s64
      %p78 = scmp.eq.s32.totalorder %s16, 1
      %p79 = por %p77, %p78
      %p81 = scmp.ne.s32.totalorder %s64, %s80
      %p82 = scmp.eq.s32.totalorder %s16, 0
      %p83 = por %p81, %p82
      %p84 = scmp.le.s32.totalorder 1, %s10
      %p85 = scmp.lt.s32.totalorder %s10, 3
      %p86 = pnand %p84, %p85
      %p87 = pneg %p86
      // Predicated region
      $region9: #{tpu_custom_call.1} parent=5 // pred_check
        _
      $region10: #{tpu_custom_call.1} parent=5 // pred_check_branch
        %89 = sbr.rel (%p86) target = $region12
      $region11: #{tpu_custom_call.1} parent=5 // pred_region
        %s90 = ssub.s32 %s10, 1
      $region12: #{tpu_custom_call.1} parent=5 // pred_fallthru
        _
      %p91 = scmp.lt.s32.totalorder %s10, 2
      // Predicated region
      $region13: #{tpu_custom_call.1} parent=5 // pred_check
        %p92 = pneg %p91
      $region14: #{tpu_custom_call.1} parent=5 // pred_check_branch
        %94 = sbr.rel (%p92) target = $region16
      $region15: #{tpu_custom_call.1} parent=5 // pred_region
        // Predicated region
        $region17: #{tpu_custom_call.1} parent=15 // pred_check
          %p95 = pneg %p44
        $region18: #{tpu_custom_call.1} parent=15 // pred_check_branch
          %97 = sbr.rel (%p95) target = $region20
        $region19: #{tpu_custom_call.1} parent=15 // pred_region
          %s98 = sand.u32 %s34, 1
          %s99 = scalar_lea.sflag [#allocation4], %s98
          %s100 = sand.u32 %s34, 1
          %s101 = smul.addr %s100, 8
          %s102 = scalar_lea.vmem [#allocation3], %s101
          %s103 = smul.u32 2, %s18
          %s105 = ssub.s32 128, 128
          %106 = vsyncadd %s99, %s105
          %s107 = smul.addr %s17, 2
          %s108 = sadd.s32 %s103, %s107
          %s109 = smul.addr %s108, 64
          %s110 = scalar_lea.hbm %s0, %s109
          %s112 = sshll.u32 %s102, 4
          %s113 = int_to_ptr.vmem [resolvable:$true] %s112
          %115 = dma.hbm_to_vmem [thread:$0]  %s110, 128, %s113, %s99
        $region20: #{tpu_custom_call.1} parent=15 // pred_fallthru
          _
      $region16: #{tpu_custom_call.1} parent=5 // pred_fallthru
        _
      %p116 = scmp.le.s32.totalorder 1, %s10
      %p117 = scmp.lt.s32.totalorder %s10, 3
      %p118 = pnand %p116, %p117
      %p119 = pneg %p118
      // Predicated region
      $region21: #{tpu_custom_call.1} parent=5 // pred_check
        _
      $region22: #{tpu_custom_call.1} parent=5 // pred_check_branch
        %121 = sbr.rel (%p118) target = $region24
      $region23: #{tpu_custom_call.1} parent=5 // pred_region
        %s122 = ssub.s32 %s10, 1
        %s123 = sand.u32 %s37, 1
        %s124 = scalar_lea.sflag [#allocation4], %s123
        %s125 = sand.u32 %s37, 1
        %s126 = smul.addr %s125, 8
        %s127 = scalar_lea.vmem [#allocation3], %s126
        // Predicated region
        $region25: #{tpu_custom_call.1} parent=23 // pred_check
          %p128 = pneg %p50
        $region26: #{tpu_custom_call.1} parent=23 // pred_check_branch
          %130 = sbr.rel (%p128) target = $region28
        $region27: #{tpu_custom_call.1} parent=23 // pred_region
          %131 = dma.done %s124, 128
        $region28: #{tpu_custom_call.1} parent=23 // pred_fallthru
          _
        %s132 = sand.u32 %s37, 1
        %s133 = scalar_lea.sflag [#allocation4], %s132
        %s134 = sand.u32 %s37, 1
        %s135 = smul.addr %s134, 8
        %s136 = scalar_lea.vmem [#allocation3], %s135
        %p137 = pneg %p50
        %p138 = pneg %p47
        %p139 = pneg %p76
        %p140 = pneg %p73
        %p141 = scmp.lt.s32.totalorder %s19, 1
        %s142 = scalar_select %p141, %s19, 1
        %s143 = smul.addr %s142, 4
        %s144 = scalar_lea.vmem %s1, %s143
        %s145 = smul.u32 2, %s20
        %p146 = scmp.lt.s32.totalorder %s19, 1
        %s147 = scalar_select %p146, %s19, 1
        %s148 = smul.addr %s147, 4
        %s149 = scalar_lea.vmem %s1, %s148
        %p150 = scmp.eq.s32.totalorder %s20, 0
        // Predicated region
        $region29: #{tpu_custom_call.1} parent=23 // pred_check
          %p151 = pneg %p150
        $region30: #{tpu_custom_call.1} parent=23 // pred_check_branch
          %153 = sbr.rel (%p151) target = $region32
        $region31: #{tpu_custom_call.1} parent=23 // pred_region
          %154 = vst [vmem:[#allocation2] sm:$0xf] 0.0
        $region32: #{tpu_custom_call.1} parent=23 // pred_fallthru
          _
        %v155 = vld [vmem:[%s127] sm:$0xff]
        %v157 = vrot.slane %v155, 4
        %v159 = vadd.f32 %v155, %v157
        %v160 = vld [vmem:[#allocation2] sm:$0xf]
        %v161 = vadd.f32 %v160, %v159
        %162 = vst [vmem:[#allocation2] sm:$0xf] %v161
        // Predicated region
        $region33: #{tpu_custom_call.1} parent=23 // pred_check
          %p163 = pneg %p150
        $region34: #{tpu_custom_call.1} parent=23 // pred_check_branch
          %165 = sbr.rel (%p163) target = $region36
        $region35: #{tpu_custom_call.1} parent=23 // pred_region
          %v166 = vld [vmem:[#allocation2] sm:$0xf]
          %vm167 = vcmask 1043456
          %v168 = vsel %vm167, %v166, 0.0
          %169 = vadd.xlane.f32.xlu0 %v168
          %v170 = vpop.xlane.xlu0 %169
          %vm171 = vcmask 3072
          %172 = vst.msk [vmem:[%s149] sm:$0xf] %vm171, %v170
        $region36: #{tpu_custom_call.1} parent=23 // pred_fallthru
          _
        %p173 = scmp.lt.s32.totalorder %s19, 1
        %s174 = scalar_select %p173, %s19, 1
        %s175 = smul.addr %s174, 4
        %s176 = scalar_lea.vmem %s1, %s175
        // Predicated region
        $region37: #{tpu_custom_call.1} parent=23 // pred_check
          %p177 = pneg %p73
        $region38: #{tpu_custom_call.1} parent=23 // pred_check_branch
          %179 = sbr.rel (%p177) target = $region40
        $region39: #{tpu_custom_call.1} parent=23 // pred_region
          _
        $region40: #{tpu_custom_call.1} parent=23 // pred_fallthru
          _
      $region24: #{tpu_custom_call.1} parent=5 // pred_fallthru
        _
      %p180 = scmp.le.s32.totalorder 2, %s10
      // Predicated region
      $region41: #{tpu_custom_call.1} parent=5 // pred_check
        %p181 = pneg %p180
      $region42: #{tpu_custom_call.1} parent=5 // pred_check_branch
        %183 = sbr.rel (%p181) target = $region44
      $region43: #{tpu_custom_call.1} parent=5 // pred_region
        %s184 = ssub.s32 %s10, 2
        // Predicated region
        $region45: #{tpu_custom_call.1} parent=43 // pred_check
          %p185 = pneg %p79
        $region46: #{tpu_custom_call.1} parent=43 // pred_check_branch
          %187 = sbr.rel (%p185) target = $region48
        $region47: #{tpu_custom_call.1} parent=43 // pred_region
          %p188 = scmp.lt.s32.totalorder %s21, 1
          %s189 = scalar_select %p188, %s21, 1
          %s190 = smul.addr %s189, 4
          %s191 = scalar_lea.vmem %s1, %s190
        $region48: #{tpu_custom_call.1} parent=43 // pred_fallthru
          _
      $region44: #{tpu_custom_call.1} parent=5 // pred_fallthru
        _
    $region6: #{tpu_custom_call.1} parent=1 // loop_footer
      %s14 = sadd.s32 1, %s10
    $region7: #{tpu_custom_call.1} parent=1 // loop_footer_branch
      %9 = sbr.rel target = $region3
    $region8: #{tpu_custom_call.1} parent=1 // loop_exit
      _
    %192 = vsyncpa [#allocation4], 1
    %s193 = scalar_lea.sflag [#allocation4], 1
    %194 = vsyncpa %s193, 1

</llo_original>
